<compile_context>
chip_gen: v7x
topology: tpu7x:2x2x1
jax: 0.10.0
libtpu: 0.0.40
codegen_flags: <defaults>
</compile_context>

<pallas_src>
import jax
import jax.numpy as jnp
from jax.experimental import pallas as pl
from jax.experimental.pallas import tpu as pltpu

LATENT_DIM = 10
DATA_DIM = 2
H1 = 128
H2 = 256
NEG_SLOPE = 0.2


def _leaky_relu(x):
    # Identical to where(x > 0, x, slope*x) for 0 < slope < 1.
    return jnp.maximum(x, NEG_SLOPE * x)


def _round_up(x, m):
    return ((x + m - 1) // m) * m


def _choose_block_m(batch):
    """Batch tile: large (amortize ~0.35us/step overhead), 256-aligned for the
    v6e/v7x MXU, and sized so batches >512 produce >=2 grid steps (both v7x
    TensorCores get work)."""
    bm = _round_up(max(1, (batch + 1) // 2), 256)
    return int(min(2048, max(256, bm)))


def generator_kernel(x_ref, w1_ref, b1_ref, w2_ref, b2_ref, w3_ref, b3_ref,
                     out_ref):
    # x tile: (BM, LATENT_DIM) f32 -> bf16 cast on the VPU (hidden under MXU).
    x = x_ref[...].astype(jnp.bfloat16)

    h1 = jnp.dot(x, w1_ref[...], preferred_element_type=jnp.float32)
    h1 = _leaky_relu(h1 + b1_ref[...])                      # (BM, 128) f32

    h2 = jnp.dot(h1.astype(jnp.bfloat16), w2_ref[...],
                 preferred_element_type=jnp.float32)
    h2 = _leaky_relu(h2 + b2_ref[...])                      # (BM, 256) f32

    y = jnp.dot(h2.astype(jnp.bfloat16), w3_ref[...],
                preferred_element_type=jnp.float32)
    out_ref[...] = (y + b3_ref[...]).astype(out_ref.dtype)  # (BM, DATA_DIM)


def prepare_params(params):
    """One-time preprocessing (hoisted out of the per-call path): bf16 copies
    of the weights for the MXU; biases stay f32."""
    return {
        "w1": params["w1"].astype(jnp.bfloat16),
        "b1": params["b1"],
        "w2": params["w2"].astype(jnp.bfloat16),
        "b2": params["b2"],
        "w3": params["w3"].astype(jnp.bfloat16),
        "b3": params["b3"],
    }


@jax.jit
def generator_forward(x, prep):
    """x: (B, latent_dim) float32. prep: output of prepare_params()."""
    B = x.shape[0]
    bm = _choose_block_m(B)
    nb = pl.cdiv(B, bm)

    # Weights/biases: same block every grid step -> VMEM-resident (DMA'd once).
    resident = lambda shape: pl.BlockSpec(shape, lambda i: (0, 0))

    flops = 2 * B * (LATENT_DIM * H1 + H1 * H2 + H2 * DATA_DIM)
    bytes_accessed = (
        4 * x.size                                                    # x read
        + 2 * (prep["w1"].size + prep["w2"].size + prep["w3"].size)   # bf16 w
        + 4 * (prep["b1"].size + prep["b2"].size + prep["b3"].size)   # f32 b
        + 4 * B * DATA_DIM)                                           # out

    out = pl.pallas_call(
        generator_kernel,
        out_shape=jax.ShapeDtypeStruct((B, DATA_DIM), jnp.float32),
        grid=(nb,),
        in_specs=[
            pl.BlockSpec((bm, LATENT_DIM), lambda i: (i, 0)),   # streamed x
            resident((LATENT_DIM, H1)),
            resident((1, H1)),
            resident((H1, H2)),
            resident((1, H2)),
            resident((H2, DATA_DIM)),
            resident((1, DATA_DIM)),
        ],
        out_specs=pl.BlockSpec((bm, DATA_DIM), lambda i: (i, 0)),
        compiler_params=pltpu.CompilerParams(
            dimension_semantics=("parallel",),
            vmem_limit_bytes=32 * 1024 * 1024),
        cost_estimate=pl.CostEstimate(
            flops=flops, transcendentals=0, bytes_accessed=bytes_accessed),
    )(x, prep["w1"], prep["b1"], prep["w2"], prep["b2"],
      prep["w3"], prep["b3"])

    return out


def init_params(key):
    """Deterministic init mimicking nn.Linear's U(-1/sqrt(fan_in), ...)."""
    keys = jax.random.split(key, 6)

    def linear(kw, kb, fan_in, fan_out):
        bound = 1.0 / jnp.sqrt(fan_in)
        w = jax.random.uniform(kw, (fan_in, fan_out), jnp.float32,
                               minval=-bound, maxval=bound)
        b = jax.random.uniform(kb, (1, fan_out), jnp.float32,
                               minval=-bound, maxval=bound)
        return w, b

    w1, b1 = linear(keys[0], keys[1], LATENT_DIM, H1)
    w2, b2 = linear(keys[2], keys[3], H1, H2)
    w3, b3 = linear(keys[4], keys[5], H2, DATA_DIM)
    return {"w1": w1, "b1": b1, "w2": w2, "b2": b2, "w3": w3, "b3": b3}


def reference_forward_f32(x, params):
    h1 = _leaky_relu(x @ params["w1"] + params["b1"])
    h2 = _leaky_relu(h1 @ params["w2"] + params["b2"])
    return h2 @ params["w3"] + params["b3"]


def reference_forward_bf16(x, params):
    """Mirrors the kernel's bf16-operand / f32-accumulate numerics."""
    xb = x.astype(jnp.bfloat16)
    h1 = _leaky_relu(
        jnp.dot(xb, params["w1"].astype(jnp.bfloat16),
                preferred_element_type=jnp.float32) + params["b1"])
    h2 = _leaky_relu(
        jnp.dot(h1.astype(jnp.bfloat16), params["w2"].astype(jnp.bfloat16),
                preferred_element_type=jnp.float32) + params["b2"])
    return jnp.dot(h2.astype(jnp.bfloat16), params["w3"].astype(jnp.bfloat16),
                   preferred_element_type=jnp.float32) + params["b3"]


if __name__ == "__main__":
    key = jax.random.PRNGKey(0)
    k_params, k_x, k_x2 = jax.random.split(key, 3)

    params = init_params(k_params)
    prep = prepare_params(params)

    # Case 1: small, ragged batch (B=200 -> one 256-row tile, masked tail).
    B = 200
    x = jax.random.normal(k_x, (B, LATENT_DIM), jnp.float32)
    out = jax.block_until_ready(generator_forward(x, prep))
    assert out.shape == (B, DATA_DIM)
    assert jnp.allclose(out, reference_forward_bf16(x, params),
                        atol=1e-2, rtol=1e-2)
    assert jnp.allclose(out, reference_forward_f32(x, params),
                        atol=5e-2, rtol=5e-2)

    # Case 2: multi-step grid with a ragged last tile (B=900 -> BM=512, nb=2).
    B2 = 900
    x2 = jax.random.normal(k_x2, (B2, LATENT_DIM), jnp.float32)
    out2 = jax.block_until_ready(generator_forward(x2, prep))
    assert out2.shape == (B2, DATA_DIM)
    assert jnp.allclose(out2, reference_forward_bf16(x2, params),
                        atol=1e-2, rtol=1e-2)
    assert jnp.allclose(out2, reference_forward_f32(x2, params),
                        atol=5e-2, rtol=5e-2)

    print("KERNEL_OK")
</pallas_src>

<mosaic_0001>
module attributes {stable_mosaic.version = 11 : i64} {
  func.func @generator_kernel(%arg0: i32, %arg1: memref<256x10xf32, #tpu.memory_space<vmem>>, %arg2: memref<10x128xbf16, #tpu.memory_space<vmem>>, %arg3: memref<1x128xf32, #tpu.memory_space<vmem>>, %arg4: memref<128x256xbf16, #tpu.memory_space<vmem>>, %arg5: memref<1x256xf32, #tpu.memory_space<vmem>>, %arg6: memref<256x2xbf16, #tpu.memory_space<vmem>>, %arg7: memref<1x2xf32, #tpu.memory_space<vmem>>, %arg8: memref<256x2xf32, #tpu.memory_space<vmem>>) attributes {dimension_semantics = [#tpu.dimension_semantics<parallel>], iteration_bounds = array<i64: 1>, scalar_prefetch = 0 : i64, scratch_operands = 0 : i64, tpu.core_type = #tpu.core_type<tc>, window_params = [{transform_indices = @transform_0, window_bounds = array<i64: 256, 10>}, {pipeline_mode = #tpu.pipeline_mode<synchronous>, transform_indices = @transform_1, window_bounds = array<i64: 10, 128>}, {pipeline_mode = #tpu.pipeline_mode<synchronous>, transform_indices = @transform_2, window_bounds = array<i64: 1, 128>}, {pipeline_mode = #tpu.pipeline_mode<synchronous>, transform_indices = @transform_3, window_bounds = array<i64: 128, 256>}, {pipeline_mode = #tpu.pipeline_mode<synchronous>, transform_indices = @transform_4, window_bounds = array<i64: 1, 256>}, {pipeline_mode = #tpu.pipeline_mode<synchronous>, transform_indices = @transform_5, window_bounds = array<i64: 256, 2>}, {pipeline_mode = #tpu.pipeline_mode<synchronous>, transform_indices = @transform_6, window_bounds = array<i64: 1, 2>}, {transform_indices = @transform_7, window_bounds = array<i64: 256, 2>}]} {
    %c0 = arith.constant 0 : index
    %c0_0 = arith.constant 0 : index
    %0 = vector.load %arg1[%c0, %c0_0] : memref<256x10xf32, #tpu.memory_space<vmem>>, vector<256x10xf32>
    %1 = arith.truncf %0 : vector<256x10xf32> to vector<256x10xbf16>
    %c0_1 = arith.constant 0 : index
    %c0_2 = arith.constant 0 : index
    %2 = vector.load %arg2[%c0_1, %c0_2] : memref<10x128xbf16, #tpu.memory_space<vmem>>, vector<10x128xbf16>
    %cst = arith.constant dense<0.000000e+00> : vector<256x128xf32>
    %3 = tpu.matmul %1, %2, %cst {dimension_numbers = #tpu.dot_dimension_numbers<[1], [0], [0], [1], [0, 0, 1, 1], [], []>} : vector<256x10xbf16>, vector<10x128xbf16>, vector<256x128xf32> -> vector<256x128xf32>
    %c0_3 = arith.constant 0 : index
    %c0_4 = arith.constant 0 : index
    %4 = vector.load %arg3[%c0_3, %c0_4] : memref<1x128xf32, #tpu.memory_space<vmem>>, vector<1x128xf32>
    %5 = vector.broadcast %4 : vector<1x128xf32> to vector<256x128xf32>
    %6 = arith.addf %3, %5 : vector<256x128xf32>
    %cst_5 = arith.constant 2.000000e-01 : f32
    %7 = vector.broadcast %cst_5 : f32 to vector<256x128xf32>
    %8 = arith.mulf %7, %6 : vector<256x128xf32>
    %9 = arith.maximumf %6, %8 : vector<256x128xf32>
    %10 = arith.truncf %9 : vector<256x128xf32> to vector<256x128xbf16>
    %c0_6 = arith.constant 0 : index
    %c0_7 = arith.constant 0 : index
    %11 = vector.load %arg4[%c0_6, %c0_7] : memref<128x256xbf16, #tpu.memory_space<vmem>>, vector<128x256xbf16>
    %cst_8 = arith.constant dense<0.000000e+00> : vector<256x256xf32>
    %12 = tpu.matmul %10, %11, %cst_8 {dimension_numbers = #tpu.dot_dimension_numbers<[1], [0], [0], [1], [0, 0, 1, 1], [], []>} : vector<256x128xbf16>, vector<128x256xbf16>, vector<256x256xf32> -> vector<256x256xf32>
    %c0_9 = arith.constant 0 : index
    %c0_10 = arith.constant 0 : index
    %13 = vector.load %arg5[%c0_9, %c0_10] : memref<1x256xf32, #tpu.memory_space<vmem>>, vector<1x256xf32>
    %14 = vector.broadcast %13 : vector<1x256xf32> to vector<256x256xf32>
    %15 = arith.addf %12, %14 : vector<256x256xf32>
    %cst_11 = arith.constant 2.000000e-01 : f32
    %16 = vector.broadcast %cst_11 : f32 to vector<256x256xf32>
    %17 = arith.mulf %16, %15 : vector<256x256xf32>
    %18 = arith.maximumf %15, %17 : vector<256x256xf32>
    %19 = arith.truncf %18 : vector<256x256xf32> to vector<256x256xbf16>
    %c0_12 = arith.constant 0 : index
    %c0_13 = arith.constant 0 : index
    %20 = vector.load %arg6[%c0_12, %c0_13] : memref<256x2xbf16, #tpu.memory_space<vmem>>, vector<256x2xbf16>
    %cst_14 = arith.constant dense<0.000000e+00> : vector<256x2xf32>
    %21 = tpu.matmul %19, %20, %cst_14 {dimension_numbers = #tpu.dot_dimension_numbers<[1], [0], [0], [1], [0, 0, 1, 1], [], []>} : vector<256x256xbf16>, vector<256x2xbf16>, vector<256x2xf32> -> vector<256x2xf32>
    %c0_15 = arith.constant 0 : index
    %c0_16 = arith.constant 0 : index
    %22 = vector.load %arg7[%c0_15, %c0_16] : memref<1x2xf32, #tpu.memory_space<vmem>>, vector<1x2xf32>
    %23 = vector.broadcast %22 : vector<1x2xf32> to vector<256x2xf32>
    %24 = arith.addf %21, %23 : vector<256x2xf32>
    %c0_17 = arith.constant 0 : index
    %c0_18 = arith.constant 0 : index
    %25 = vector.load %arg8[%c0_17, %c0_18] : memref<256x2xf32, #tpu.memory_space<vmem>>, vector<256x2xf32>
    tpu.vector_store %arg8[%c0_17, %c0_18], %24 {strides = array<i32>} : memref<256x2xf32, #tpu.memory_space<vmem>>, vector<256x2xf32>,
    return
  }
  func.func @transform_0(%arg0: i32) -> (i32, i32) {
    %c0_i32 = arith.constant 0 : i32
    %c0_i32_0 = arith.constant 0 : i32
    return %arg0, %c0_i32 : i32, i32
  }
  func.func @transform_1(%arg0: i32) -> (i32, i32) {
    %c0_i32 = arith.constant 0 : i32
    %c0_i32_0 = arith.constant 0 : i32
    %c0_i32_1 = arith.constant 0 : i32
    return %c0_i32, %c0_i32_0 : i32, i32
  }
  func.func @transform_2(%arg0: i32) -> (i32, i32) {
    %c0_i32 = arith.constant 0 : i32
    %c0_i32_0 = arith.constant 0 : i32
    %c0_i32_1 = arith.constant 0 : i32
    return %c0_i32, %c0_i32_0 : i32, i32
  }
  func.func @transform_3(%arg0: i32) -> (i32, i32) {
    %c0_i32 = arith.constant 0 : i32
    %c0_i32_0 = arith.constant 0 : i32
    %c0_i32_1 = arith.constant 0 : i32
    return %c0_i32, %c0_i32_0 : i32, i32
  }
  func.func @transform_4(%arg0: i32) -> (i32, i32) {
    %c0_i32 = arith.constant 0 : i32
    %c0_i32_0 = arith.constant 0 : i32
    %c0_i32_1 = arith.constant 0 : i32
    return %c0_i32, %c0_i32_0 : i32, i32
  }
  func.func @transform_5(%arg0: i32) -> (i32, i32) {
    %c0_i32 = arith.constant 0 : i32
    %c0_i32_0 = arith.constant 0 : i32
    %c0_i32_1 = arith.constant 0 : i32
    return %c0_i32, %c0_i32_0 : i32, i32
  }
  func.func @transform_6(%arg0: i32) -> (i32, i32) {
    %c0_i32 = arith.constant 0 : i32
    %c0_i32_0 = arith.constant 0 : i32
    %c0_i32_1 = arith.constant 0 : i32
    return %c0_i32, %c0_i32_0 : i32, i32
  }
  func.func @transform_7(%arg0: i32) -> (i32, i32) {
    %c0_i32 = arith.constant 0 : i32
    %c0_i32_0 = arith.constant 0 : i32
    return %arg0, %c0_i32 : i32, i32
  }
}

</mosaic_0001>

<llo_original>
// kernel: generator_forward.1
$region0: #{generator_forward.1}
  #allocation0 [shape = 'u32[]', space=smem, size = 0x4, offset = 0x4, fixed_abs, tag = 'smem constant byte address 0x4 - core index']
  #allocation1 [shape = 'u32[144,128]{1,0:T(1,128)}', space=vmem, size = 0x12000, scoped, tag = 'internal scratch']
  %s0 = inlined_call_operand.vmem [shape: f32[200,10], index: 0, kind: input, shape index: {}]
  %s1 = inlined_call_operand.vmem [shape: bf16[10,128], index: 1, kind: input, shape index: {}]
  %s2 = inlined_call_operand.vmem [shape: f32[1,128], index: 2, kind: input, shape index: {}]
  %s3 = inlined_call_operand.vmem [shape: bf16[128,256], index: 3, kind: input, shape index: {}]
  %s4 = inlined_call_operand.vmem [shape: f32[1,256], index: 4, kind: input, shape index: {}]
  %s5 = inlined_call_operand.vmem [shape: bf16[256,2], index: 5, kind: input, shape index: {}]
  %s6 = inlined_call_operand.vmem [shape: f32[1,2], index: 6, kind: input, shape index: {}]
  %s7 = inlined_call_operand.vmem [shape: f32[200,2], index: 7, kind: output, shape index: {}]
  %s8 = sld [smem:[#allocation0]]
  $region72: #{generator_forward.1} parent=0
    _
  %s10 = ssub.s32 1, %s8
  %s11 = scalar_select 0, %s10, %s8
  $region1: #{generator_forward.1} parent=0
    #allocation2 [shape = 'u8[131072]{0}', space=vmem, size = 0x20000, scoped, tag = 'output window, operand 0, single buffered']
    // Predicated region
    $region2: #{generator_forward.1} parent=1 // pred_check
      _
    $region3: #{generator_forward.1} parent=1 // pred_check_branch
      %13 = sbr.rel (0) target = $region5
    $region4: #{generator_forward.1} parent=1 // pred_region
      _
    $region5: #{generator_forward.1} parent=1 // pred_fallthru
      _
    // Predicated region
    $region6: #{generator_forward.1} parent=1 // pred_check
      _
    $region7: #{generator_forward.1} parent=1 // pred_check_branch
      %15 = sbr.rel (0) target = $region9
    $region8: #{generator_forward.1} parent=1 // pred_region
      _
    $region9: #{generator_forward.1} parent=1 // pred_fallthru
      _
    // Predicated region
    $region10: #{generator_forward.1} parent=1 // pred_check
      _
    $region11: #{generator_forward.1} parent=1 // pred_check_branch
      %17 = sbr.rel (0) target = $region13
    $region12: #{generator_forward.1} parent=1 // pred_region
      _
    $region13: #{generator_forward.1} parent=1 // pred_fallthru
      _
    // Predicated region
    $region14: #{generator_forward.1} parent=1 // pred_check
      _
    $region15: #{generator_forward.1} parent=1 // pred_check_branch
      %19 = sbr.rel (0) target = $region17
    $region16: #{generator_forward.1} parent=1 // pred_region
      _
    $region17: #{generator_forward.1} parent=1 // pred_fallthru
      _
    // Predicated region
    $region18: #{generator_forward.1} parent=1 // pred_check
      _
    $region19: #{generator_forward.1} parent=1 // pred_check_branch
      %21 = sbr.rel (0) target = $region21
    $region20: #{generator_forward.1} parent=1 // pred_region
      _
    $region21: #{generator_forward.1} parent=1 // pred_fallthru
      _
    // Predicated region
    $region22: #{generator_forward.1} parent=1 // pred_check
      _
    $region23: #{generator_forward.1} parent=1 // pred_check_branch
      %23 = sbr.rel (0) target = $region25
    $region24: #{generator_forward.1} parent=1 // pred_region
      _
    $region25: #{generator_forward.1} parent=1 // pred_fallthru
      _
    // Predicated region
    $region26: #{generator_forward.1} parent=1 // pred_check
      _
    $region27: #{generator_forward.1} parent=1 // pred_check_branch
      %25 = sbr.rel (0) target = $region29
    $region28: #{generator_forward.1} parent=1 // pred_region
      _
    $region29: #{generator_forward.1} parent=1 // pred_fallthru
      _
    %v27 = vld [vmem:[%s0] sm:$0xff]
    %v28 = vld [vmem:[%s0 + $0x8] sm:$0xff]
    %v29 = vld [vmem:[%s0 + $0x10] sm:$0xff]
    %v30 = vld [vmem:[%s0 + $0x18] sm:$0xff]
    %v31 = vld [vmem:[%s0 + $0x20] sm:$0xff]
    %v32 = vld [vmem:[%s0 + $0x28] sm:$0xff]
    %v33 = vld [vmem:[%s0 + $0x30] sm:$0xff]
    %v34 = vld [vmem:[%s0 + $0x38] sm:$0xff]
    %v35 = vld [vmem:[%s0 + $0x40] sm:$0xff]
    %v36 = vld [vmem:[%s0 + $0x48] sm:$0xff]
    %v37 = vld [vmem:[%s0 + $0x50] sm:$0xff]
    %v38 = vld [vmem:[%s0 + $0x58] sm:$0xff]
    %v39 = vld [vmem:[%s0 + $0x60] sm:$0xff]
    %v40 = vld [vmem:[%s0 + $0x68] sm:$0xff]
    %v41 = vld [vmem:[%s0 + $0x70] sm:$0xff]
    %v42 = vld [vmem:[%s0 + $0x78] sm:$0xff]
    %v43 = vld [vmem:[%s0 + $0x80] sm:$0xff]
    %v44 = vld [vmem:[%s0 + $0x88] sm:$0xff]
    %v45 = vld [vmem:[%s0 + $0x90] sm:$0xff]
    %v46 = vld [vmem:[%s0 + $0x98] sm:$0xff]
    %v47 = vld [vmem:[%s0 + $0xa0] sm:$0xff]
    %v48 = vld [vmem:[%s0 + $0xa8] sm:$0xff]
    %v49 = vld [vmem:[%s0 + $0xb0] sm:$0xff]
    %v50 = vld [vmem:[%s0 + $0xb8] sm:$0xff]
    %v51 = vld [vmem:[%s0 + $0xc0] sm:$0xff]
    %v52 = vld [vmem:[%s0 + $0xc8] sm:$0xff]
    %v53 = vld [vmem:[%s0 + $0xd0] sm:$0xff]
    %v54 = vld [vmem:[%s0 + $0xd8] sm:$0xff]
    %v55 = vld [vmem:[%s0 + $0xe0] sm:$0xff]
    %v56 = vld [vmem:[%s0 + $0xe8] sm:$0xff]
    %v57 = vld [vmem:[%s0 + $0xf0] sm:$0xff]
    %v58 = vld [vmem:[%s0 + $0xf8] sm:$0xff]
    %v59 = vpack.c.bf16 %v28, %v27
    %v60 = vpack.c.bf16 %v30, %v29
    %v61 = vpack.c.bf16 %v32, %v31
    %v62 = vpack.c.bf16 %v34, %v33
    %v63 = vpack.c.bf16 %v36, %v35
    %v64 = vpack.c.bf16 %v38, %v37
    %v65 = vpack.c.bf16 %v40, %v39
    %v66 = vpack.c.bf16 %v42, %v41
    %v67 = vpack.c.bf16 %v44, %v43
    %v68 = vpack.c.bf16 %v46, %v45
    %v69 = vpack.c.bf16 %v48, %v47
    %v70 = vpack.c.bf16 %v50, %v49
    %v71 = vpack.c.bf16 %v52, %v51
    %v72 = vpack.c.bf16 %v54, %v53
    %v73 = vpack.c.bf16 %v56, %v55
    %v74 = vpack.c.bf16 %v58, %v57
    %v75 = vld [vmem:[%s1] sm:$0xf]
    %v76 = vld [vmem:[%s1 + $0x4] sm:$0x1]
    %v77 = vld [vmem:[%s2] sm:$0x1]
    %v79 = vlaneseq
    %v80 = vshrl.u32 %v79, 7
    %v81 = vsub.s32 0, %v80
    %v82 = vrot.slane %v77, %v81
    %v86 = vunpack.c.l.b16 %v75
    %v87 = vunpack.c.l.b16 %v76
    %v88 = vpack.c.b16 %v87, %v86
    %vm89 = vcmask 80896
    %v91 = vsel %vm89, %v59, 0
    %v94 = vsel %vm89, %v60, 0
    %v97 = vsel %vm89, %v61, 0
    %v100 = vsel %vm89, %v62, 0
    %v103 = vsel %vm89, %v63, 0
    %v106 = vsel %vm89, %v64, 0
    %v109 = vsel %vm89, %v65, 0
    %v112 = vsel %vm89, %v66, 0
    %v115 = vsel %vm89, %v67, 0
    %v118 = vsel %vm89, %v68, 0
    %v121 = vsel %vm89, %v69, 0
    %v124 = vsel %vm89, %v70, 0
    %v127 = vsel %vm89, %v71, 0
    %v130 = vsel %vm89, %v72, 0
    %v133 = vsel %vm89, %v73, 0
    %v136 = vsel %vm89, %v74, 0
    %vm138 = vcmask 1044480
    %v140 = vsel %vm138, %v88, 0
    %142 = vmatprep.subr.bf16.mxu0 0
    %143 = vmatpush1.bf16.msra.mxu0 %v140
    %144 = vmatprep.subr.bf16.mxu0 0
    %145 = vmatpush1.bf16.msra.mxu0 0
    %146 = vmatprep.subr.bf16.mxu0 0
    %147 = vmatpush1.bf16.msra.mxu0 0
    %148 = vmatprep.subr.bf16.mxu0 0
    %149 = vmatpush1.bf16.msra.mxu0 0
    %150 = vmatprep.subr.bf16.mxu0 0
    %151 = vmatpush1.bf16.msra.mxu0 0
    %152 = vmatprep.subr.bf16.mxu0 0
    %153 = vmatpush1.bf16.msra.mxu0 0
    %154 = vmatprep.subr.bf16.mxu0 0
    %155 = vmatpush1.bf16.msra.mxu0 0
    %156 = vmatprep.subr.bf16.mxu0 0
    %157 = vmatpush1.bf16.msra.mxu0 0
    %158 = vmatprep.subr.bf16.mxu0 0
    %159 = vmatpush1.bf16.msra.mxu0 0
    %160 = vmatprep.subr.bf16.mxu0 0
    %161 = vmatpush1.bf16.msra.mxu0 0
    %162 = vmatprep.subr.bf16.mxu0 0
    %163 = vmatpush1.bf16.msra.mxu0 0
    %164 = vmatprep.subr.bf16.mxu0 0
    %165 = vmatpush1.bf16.msra.mxu0 0
    %166 = vmatprep.subr.bf16.mxu0 0
    %167 = vmatpush1.bf16.msra.mxu0 0
    %168 = vmatprep.subr.bf16.mxu0 0
    %169 = vmatpush1.bf16.msra.mxu0 0
    %170 = vmatprep.subr.bf16.mxu0 0
    %171 = vmatpush1.bf16.msra.mxu0 0
    %172 = vmatprep.subr.bf16.mxu0 0
    %173 = vmatpush1.bf16.msra.mxu0 0
    %174 = vmatprep.mubr.bf16.mxu0 0
    %175 = vmatmul.mubr.bf16.gmra.mrb[0].mxu0 %v91
    %v176 = vpop.f32.mrb[0].mxu0
    %v177 = vadd.f32 %v82, %v176
    %v178 = vpop.f32.mrb[0].mxu0
    %v179 = vpop.f32.mrb[0].mxu0
    %v180 = vadd.f32 %v82, %v179
    %v181 = vpop.f32.mrb[0].mxu0
    %182 = vmatprep.mubr.bf16.mxu0 0
    %183 = vmatmul.mubr.bf16.gmra.mrb[0].mxu0 %v94
    %v184 = vpop.f32.mrb[0].mxu0
    %v185 = vadd.f32 %v82, %v184
    %v186 = vpop.f32.mrb[0].mxu0
    %v187 = vpop.f32.mrb[0].mxu0
    %v188 = vadd.f32 %v82, %v187
    %v189 = vpop.f32.mrb[0].mxu0
    %190 = vmatprep.mubr.bf16.mxu0 0
    %191 = vmatmul.mubr.bf16.gmra.mrb[0].mxu0 %v97
    %v192 = vpop.f32.mrb[0].mxu0
    %v193 = vadd.f32 %v82, %v192
    %v194 = vpop.f32.mrb[0].mxu0
    %v195 = vpop.f32.mrb[0].mxu0
    %v196 = vadd.f32 %v82, %v195
    %v197 = vpop.f32.mrb[0].mxu0
    %198 = vmatprep.mubr.bf16.mxu0 0
    %199 = vmatmul.mubr.bf16.gmra.mrb[0].mxu0 %v100
    %v200 = vpop.f32.mrb[0].mxu0
    %v201 = vadd.f32 %v82, %v200
    %v202 = vpop.f32.mrb[0].mxu0
    %v203 = vpop.f32.mrb[0].mxu0
    %v204 = vadd.f32 %v82, %v203
    %v205 = vpop.f32.mrb[0].mxu0
    %206 = vmatprep.mubr.bf16.mxu0 0
    %207 = vmatmul.mubr.bf16.gmra.mrb[0].mxu0 %v103
    %v208 = vpop.f32.mrb[0].mxu0
    %v209 = vadd.f32 %v82, %v208
    %v210 = vpop.f32.mrb[0].mxu0
    %v211 = vpop.f32.mrb[0].mxu0
    %v212 = vadd.f32 %v82, %v211
    %v213 = vpop.f32.mrb[0].mxu0
    %214 = vmatprep.mubr.bf16.mxu0 0
    %215 = vmatmul.mubr.bf16.gmra.mrb[0].mxu0 %v106
    %v216 = vpop.f32.mrb[0].mxu0
    %v217 = vadd.f32 %v82, %v216
    %v218 = vpop.f32.mrb[0].mxu0
    %v219 = vpop.f32.mrb[0].mxu0
    %v220 = vadd.f32 %v82, %v219
    %v221 = vpop.f32.mrb[0].mxu0
    %222 = vmatprep.mubr.bf16.mxu0 0
    %223 = vmatmul.mubr.bf16.gmra.mrb[0].mxu0 %v109
    %v224 = vpop.f32.mrb[0].mxu0
    %v225 = vadd.f32 %v82, %v224
    %v226 = vpop.f32.mrb[0].mxu0
    %v227 = vpop.f32.mrb[0].mxu0
    %v228 = vadd.f32 %v82, %v227
    %v229 = vpop.f32.mrb[0].mxu0
    %230 = vmatprep.mubr.bf16.mxu0 0
    %231 = vmatmul.mubr.bf16.gmra.mrb[0].mxu0 %v112
    %v232 = vpop.f32.mrb[0].mxu0
    %v233 = vadd.f32 %v82, %v232
    %v234 = vpop.f32.mrb[0].mxu0
    %v235 = vpop.f32.mrb[0].mxu0
    %v236 = vadd.f32 %v82, %v235
    %v237 = vpop.f32.mrb[0].mxu0
    %238 = vmatprep.mubr.bf16.mxu0 0
    %239 = vmatmul.mubr.bf16.gmra.mrb[0].mxu0 %v115
    %v240 = vpop.f32.mrb[0].mxu0
    %v241 = vadd.f32 %v82, %v240
    %v242 = vpop.f32.mrb[0].mxu0
    %v243 = vpop.f32.mrb[0].mxu0
    %v244 = vadd.f32 %v82, %v243
    %v245 = vpop.f32.mrb[0].mxu0
    %246 = vmatprep.mubr.bf16.mxu0 0
    %247 = vmatmul.mubr.bf16.gmra.mrb[0].mxu0 %v118
    %v248 = vpop.f32.mrb[0].mxu0
    %v249 = vadd.f32 %v82, %v248
    %v250 = vpop.f32.mrb[0].mxu0
    %v251 = vpop.f32.mrb[0].mxu0
    %v252 = vadd.f32 %v82, %v251
    %v253 = vpop.f32.mrb[0].mxu0
    %254 = vmatprep.mubr.bf16.mxu0 0
    %255 = vmatmul.mubr.bf16.gmra.mrb[0].mxu0 %v121
    %v256 = vpop.f32.mrb[0].mxu0
    %v257 = vadd.f32 %v82, %v256
    %v258 = vpop.f32.mrb[0].mxu0
    %v259 = vpop.f32.mrb[0].mxu0
    %v260 = vadd.f32 %v82, %v259
    %v261 = vpop.f32.mrb[0].mxu0
    %262 = vmatprep.mubr.bf16.mxu0 0
    %263 = vmatmul.mubr.bf16.gmra.mrb[0].mxu0 %v124
    %v264 = vpop.f32.mrb[0].mxu0
    %v265 = vadd.f32 %v82, %v264
    %v266 = vpop.f32.mrb[0].mxu0
    %v267 = vpop.f32.mrb[0].mxu0
    %v268 = vadd.f32 %v82, %v267
    %v269 = vpop.f32.mrb[0].mxu0
    %270 = vmatprep.mubr.bf16.mxu0 0
    %271 = vmatmul.mubr.bf16.gmra.mrb[0].mxu0 %v127
    %v272 = vpop.f32.mrb[0].mxu0
    %v273 = vadd.f32 %v82, %v272
    %v274 = vpop.f32.mrb[0].mxu0
    %v275 = vpop.f32.mrb[0].mxu0
    %v276 = vadd.f32 %v82, %v275
    %v277 = vpop.f32.mrb[0].mxu0
    %278 = vmatprep.mubr.bf16.mxu0 0
    %279 = vmatmul.mubr.bf16.gmra.mrb[0].mxu0 %v130
    %v280 = vpop.f32.mrb[0].mxu0
    %v281 = vadd.f32 %v82, %v280
    %v282 = vpop.f32.mrb[0].mxu0
    %v283 = vpop.f32.mrb[0].mxu0
    %v284 = vadd.f32 %v82, %v283
    %v285 = vpop.f32.mrb[0].mxu0
    %286 = vmatprep.mubr.bf16.mxu0 0
    %287 = vmatmul.mubr.bf16.gmra.mrb[0].mxu0 %v133
    %v288 = vpop.f32.mrb[0].mxu0
    %v289 = vadd.f32 %v82, %v288
    %v290 = vpop.f32.mrb[0].mxu0
    %v291 = vpop.f32.mrb[0].mxu0
    %v292 = vadd.f32 %v82, %v291
    %v293 = vpop.f32.mrb[0].mxu0
    %294 = vmatprep.mubr.bf16.mxu0 0
    %295 = vmatmul.mubr.bf16.gmra.mrb[0].mxu0 %v136
    %v296 = vpop.f32.mrb[0].mxu0
    %v297 = vadd.f32 %v82, %v296
    %v298 = vpop.f32.mrb[0].mxu0
    %v299 = vpop.f32.mrb[0].mxu0
    %v300 = vadd.f32 %v82, %v299
    %v301 = vpop.f32.mrb[0].mxu0
    %302 = vdwg.mxu0
    %v303 = vmul.f32 %v177, 0.2
    %v304 = vmul.f32 %v180, 0.2
    %v305 = vmul.f32 %v185, 0.2
    %v306 = vmul.f32 %v188, 0.2
    %v307 = vmul.f32 %v193, 0.2
    %v308 = vmul.f32 %v196, 0.2
    %v309 = vmul.f32 %v201, 0.2
    %v310 = vmul.f32 %v204, 0.2
    %v311 = vmul.f32 %v209, 0.2
    %v312 = vmul.f32 %v212, 0.2
    %v313 = vmul.f32 %v217, 0.2
    %v314 = vmul.f32 %v220, 0.2
    %v315 = vmul.f32 %v225, 0.2
    %v316 = vmul.f32 %v228, 0.2
    %v317 = vmul.f32 %v233, 0.2
    %v318 = vmul.f32 %v236, 0.2
    %v319 = vmul.f32 %v241, 0.2
    %v320 = vmul.f32 %v244, 0.2
    %v321 = vmul.f32 %v249, 0.2
    %v322 = vmul.f32 %v252, 0.2
    %v323 = vmul.f32 %v257, 0.2
    %v324 = vmul.f32 %v260, 0.2
    %v325 = vmul.f32 %v265, 0.2
    %v326 = vmul.f32 %v268, 0.2
    %v327 = vmul.f32 %v273, 0.2
    %v328 = vmul.f32 %v276, 0.2
    %v329 = vmul.f32 %v281, 0.2
    %v330 = vmul.f32 %v284, 0.2
    %v331 = vmul.f32 %v289, 0.2
    %v332 = vmul.f32 %v292, 0.2
    %v333 = vmul.f32 %v297, 0.2
    %v334 = vmul.f32 %v300, 0.2
    %v335 = vmax.f32 %v177, %v303
    %v336 = vmax.f32 %v180, %v304
    %v337 = vmax.f32 %v185, %v305
    %v338 = vmax.f32 %v188, %v306
    %v339 = vmax.f32 %v193, %v307
    %v340 = vmax.f32 %v196, %v308
    %v341 = vmax.f32 %v201, %v309
    %v342 = vmax.f32 %v204, %v310
    %v343 = vmax.f32 %v209, %v311
    %v344 = vmax.f32 %v212, %v312
    %v345 = vmax.f32 %v217, %v313
    %v346 = vmax.f32 %v220, %v314
    %v347 = vmax.f32 %v225, %v315
    %v348 = vmax.f32 %v228, %v316
    %v349 = vmax.f32 %v233, %v317
    %v350 = vmax.f32 %v236, %v318
    %v351 = vmax.f32 %v241, %v319
    %v352 = vmax.f32 %v244, %v320
    %v353 = vmax.f32 %v249, %v321
    %v354 = vmax.f32 %v252, %v322
    %v355 = vmax.f32 %v257, %v323
    %v356 = vmax.f32 %v260, %v324
    %v357 = vmax.f32 %v265, %v325
    %v358 = vmax.f32 %v268, %v326
    %v359 = vmax.f32 %v273, %v327
    %v360 = vmax.f32 %v276, %v328
    %v361 = vmax.f32 %v281, %v329
    %v362 = vmax.f32 %v284, %v330
    %v363 = vmax.f32 %v289, %v331
    %v364 = vmax.f32 %v292, %v332
    %v365 = vmax.f32 %v297, %v333
    %v366 = vmax.f32 %v300, %v334
    %v367 = vpack.c.bf16 %v336, %v335
    %v368 = vpack.c.bf16 %v338, %v337
    %v369 = vpack.c.bf16 %v340, %v339
    %v370 = vpack.c.bf16 %v342, %v341
    %v371 = vpack.c.bf16 %v344, %v343
    %v372 = vpack.c.bf16 %v346, %v345
    %v373 = vpack.c.bf16 %v348, %v347
    %v374 = vpack.c.bf16 %v350, %v349
    %v375 = vpack.c.bf16 %v352, %v351
    %v376 = vpack.c.bf16 %v354, %v353
    %v377 = vpack.c.bf16 %v356, %v355
    %v378 = vpack.c.bf16 %v358, %v357
    %v379 = vpack.c.bf16 %v360, %v359
    %v380 = vpack.c.bf16 %v362, %v361
    %v381 = vpack.c.bf16 %v364, %v363
    %v382 = vpack.c.bf16 %v366, %v365
    %v383 = vld [vmem:[%s3] sm:$0xff]
    %v384 = vld [vmem:[%s3 + $0x8] sm:$0xff]
    %v385 = vld [vmem:[%s3 + $0x10] sm:$0xff]
    %v386 = vld [vmem:[%s3 + $0x18] sm:$0xff]
    %v387 = vld [vmem:[%s3 + $0x20] sm:$0xff]
    %v388 = vld [vmem:[%s3 + $0x28] sm:$0xff]
    %v389 = vld [vmem:[%s3 + $0x30] sm:$0xff]
    %v390 = vld [vmem:[%s3 + $0x38] sm:$0xff]
    %v391 = vld [vmem:[%s3 + $0x40] sm:$0xff]
    %v392 = vld [vmem:[%s3 + $0x48] sm:$0xff]
    %v393 = vld [vmem:[%s3 + $0x50] sm:$0xff]
    %v394 = vld [vmem:[%s3 + $0x58] sm:$0xff]
    %v395 = vld [vmem:[%s3 + $0x60] sm:$0xff]
    %v396 = vld [vmem:[%s3 + $0x68] sm:$0xff]
    %v397 = vld [vmem:[%s3 + $0x70] sm:$0xff]
    %v398 = vld [vmem:[%s3 + $0x78] sm:$0xff]
    %v399 = vld [vmem:[%s4] sm:$0x3]
    %v401 = vlaneseq
    %v402 = vshrl.u32 %v401, 7
    %v403 = vsub.s32 0, %v402
    %v404 = vrot.slane %v399, %v403
    %v405 = vlaneseq
    %v406 = vshrl.u32 %v405, 7
    %v407 = vsub.s32 1, %v406
    %v408 = vrot.slane %v399, %v407
    %v427 = vunpack.c.l.b16 %v383
    %v428 = vunpack.c.h.b16 %v383
    %v429 = vunpack.c.l.b16 %v384
    %v430 = vunpack.c.h.b16 %v384
    %v431 = vunpack.c.l.b16 %v385
    %v432 = vunpack.c.h.b16 %v385
    %v433 = vunpack.c.l.b16 %v386
    %v434 = vunpack.c.h.b16 %v386
    %v435 = vunpack.c.l.b16 %v387
    %v436 = vunpack.c.h.b16 %v387
    %v437 = vunpack.c.l.b16 %v388
    %v438 = vunpack.c.h.b16 %v388
    %v439 = vunpack.c.l.b16 %v389
    %v440 = vunpack.c.h.b16 %v389
    %v441 = vunpack.c.l.b16 %v390
    %v442 = vunpack.c.h.b16 %v390
    %v443 = vunpack.c.l.b16 %v391
    %v444 = vunpack.c.h.b16 %v391
    %v445 = vunpack.c.l.b16 %v392
    %v446 = vunpack.c.h.b16 %v392
    %v447 = vunpack.c.l.b16 %v393
    %v448 = vunpack.c.h.b16 %v393
    %v449 = vunpack.c.l.b16 %v394
    %v450 = vunpack.c.h.b16 %v394
    %v451 = vunpack.c.l.b16 %v395
    %v452 = vunpack.c.h.b16 %v395
    %v453 = vunpack.c.l.b16 %v396
    %v454 = vunpack.c.h.b16 %v396
    %v455 = vunpack.c.l.b16 %v397
    %v456 = vunpack.c.h.b16 %v397
    %v457 = vunpack.c.l.b16 %v398
    %v458 = vunpack.c.h.b16 %v398
    %v459 = vpack.c.b16 %v429, %v427
    %v460 = vpack.c.b16 %v430, %v428
    %v461 = vpack.c.b16 %v433, %v431
    %v462 = vpack.c.b16 %v434, %v432
    %v463 = vpack.c.b16 %v437, %v435
    %v464 = vpack.c.b16 %v438, %v436
    %v465 = vpack.c.b16 %v441, %v439
    %v466 = vpack.c.b16 %v442, %v440
    %v467 = vpack.c.b16 %v445, %v443
    %v468 = vpack.c.b16 %v446, %v444
    %v469 = vpack.c.b16 %v449, %v447
    %v470 = vpack.c.b16 %v450, %v448
    %v471 = vpack.c.b16 %v453, %v451
    %v472 = vpack.c.b16 %v454, %v452
    %v473 = vpack.c.b16 %v457, %v455
    %v474 = vpack.c.b16 %v458, %v456
    %491 = vmatprep.subr.bf16.mxu0 %v460
    %492 = vmatpush1.bf16.msra.mxu0 %v459
    %493 = vmatprep.subr.bf16.mxu0 %v462
    %494 = vmatpush1.bf16.msra.mxu0 %v461
    %495 = vmatprep.subr.bf16.mxu0 %v464
    %496 = vmatpush1.bf16.msra.mxu0 %v463
    %497 = vmatprep.subr.bf16.mxu0 %v466
    %498 = vmatpush1.bf16.msra.mxu0 %v465
    %499 = vmatprep.subr.bf16.mxu0 %v468
    %500 = vmatpush1.bf16.msra.mxu0 %v467
    %501 = vmatprep.subr.bf16.mxu0 %v470
    %502 = vmatpush1.bf16.msra.mxu0 %v469
    %503 = vmatprep.subr.bf16.mxu0 %v472
    %504 = vmatpush1.bf16.msra.mxu0 %v471
    %505 = vmatprep.subr.bf16.mxu0 %v474
    %506 = vmatpush1.bf16.msra.mxu0 %v473
    %507 = vmatprep.subr.bf16.mxu0 0
    %508 = vmatpush1.bf16.msra.mxu0 0
    %509 = vmatprep.subr.bf16.mxu0 0
    %510 = vmatpush1.bf16.msra.mxu0 0
    %511 = vmatprep.subr.bf16.mxu0 0
    %512 = vmatpush1.bf16.msra.mxu0 0
    %513 = vmatprep.subr.bf16.mxu0 0
    %514 = vmatpush1.bf16.msra.mxu0 0
    %515 = vmatprep.subr.bf16.mxu0 0
    %516 = vmatpush1.bf16.msra.mxu0 0
    %517 = vmatprep.subr.bf16.mxu0 0
    %518 = vmatpush1.bf16.msra.mxu0 0
    %519 = vmatprep.subr.bf16.mxu0 0
    %520 = vmatpush1.bf16.msra.mxu0 0
    %521 = vmatprep.subr.bf16.mxu0 0
    %522 = vmatpush1.bf16.msra.mxu0 0
    %523 = vmatprep.mubr.bf16.mxu0 0
    %524 = vmatmul.mubr.bf16.gmra.mrb[0].mxu0 %v367
    %v525 = vpop.f32.mrb[0].mxu0
    %v526 = vadd.f32 %v404, %v525
    %v527 = vpop.f32.mrb[0].mxu0
    %v528 = vadd.f32 %v408, %v527
    %v529 = vpop.f32.mrb[0].mxu0
    %v530 = vadd.f32 %v404, %v529
    %v531 = vpop.f32.mrb[0].mxu0
    %v532 = vadd.f32 %v408, %v531
    %533 = vmatprep.mubr.bf16.mxu0 0
    %534 = vmatmul.mubr.bf16.gmra.mrb[0].mxu0 %v368
    %v535 = vpop.f32.mrb[0].mxu0
    %v536 = vadd.f32 %v404, %v535
    %v537 = vpop.f32.mrb[0].mxu0
    %v538 = vadd.f32 %v408, %v537
    %v539 = vpop.f32.mrb[0].mxu0
    %v540 = vadd.f32 %v404, %v539
    %v541 = vpop.f32.mrb[0].mxu0
    %v542 = vadd.f32 %v408, %v541
    %543 = vmatprep.mubr.bf16.mxu0 0
    %544 = vmatmul.mubr.bf16.gmra.mrb[0].mxu0 %v369
    %v545 = vpop.f32.mrb[0].mxu0
    %v546 = vadd.f32 %v404, %v545
    %v547 = vpop.f32.mrb[0].mxu0
    %v548 = vadd.f32 %v408, %v547
    %v549 = vpop.f32.mrb[0].mxu0
    %v550 = vadd.f32 %v404, %v549
    %v551 = vpop.f32.mrb[0].mxu0
    %v552 = vadd.f32 %v408, %v551
    %553 = vmatprep.mubr.bf16.mxu0 0
    %554 = vmatmul.mubr.bf16.gmra.mrb[0].mxu0 %v370
    %v555 = vpop.f32.mrb[0].mxu0
    %v556 = vadd.f32 %v404, %v555
    %v557 = vpop.f32.mrb[0].mxu0
    %v558 = vadd.f32 %v408, %v557
    %v559 = vpop.f32.mrb[0].mxu0
    %v560 = vadd.f32 %v404, %v559
    %v561 = vpop.f32.mrb[0].mxu0
    %v562 = vadd.f32 %v408, %v561
    %563 = vmatprep.mubr.bf16.mxu0 0
    %564 = vmatmul.mubr.bf16.gmra.mrb[0].mxu0 %v371
    %v565 = vpop.f32.mrb[0].mxu0
    %v566 = vadd.f32 %v404, %v565
    %v567 = vpop.f32.mrb[0].mxu0
    %v568 = vadd.f32 %v408, %v567
    %v569 = vpop.f32.mrb[0].mxu0
    %v570 = vadd.f32 %v404, %v569
    %v571 = vpop.f32.mrb[0].mxu0
    %v572 = vadd.f32 %v408, %v571
    %573 = vmatprep.mubr.bf16.mxu0 0
    %574 = vmatmul.mubr.bf16.gmra.mrb[0].mxu0 %v372
    %v575 = vpop.f32.mrb[0].mxu0
    %v576 = vadd.f32 %v404, %v575
    %v577 = vpop.f32.mrb[0].mxu0
    %v578 = vadd.f32 %v408, %v577
    %v579 = vpop.f32.mrb[0].mxu0
    %v580 = vadd.f32 %v404, %v579
    %v581 = vpop.f32.mrb[0].mxu0
    %v582 = vadd.f32 %v408, %v581
    %583 = vmatprep.mubr.bf16.mxu0 0
    %584 = vmatmul.mubr.bf16.gmra.mrb[0].mxu0 %v373
    %v585 = vpop.f32.mrb[0].mxu0
    %v586 = vadd.f32 %v404, %v585
    %v587 = vpop.f32.mrb[0].mxu0
    %v588 = vadd.f32 %v408, %v587
    %v589 = vpop.f32.mrb[0].mxu0
    %v590 = vadd.f32 %v404, %v589
    %v591 = vpop.f32.mrb[0].mxu0
    %v592 = vadd.f32 %v408, %v591
    %593 = vmatprep.mubr.bf16.mxu0 0
    %594 = vmatmul.mubr.bf16.gmra.mrb[0].mxu0 %v374
    %v595 = vpop.f32.mrb[0].mxu0
    %v596 = vadd.f32 %v404, %v595
    %v597 = vpop.f32.mrb[0].mxu0
    %v598 = vadd.f32 %v408, %v597
    %v599 = vpop.f32.mrb[0].mxu0
    %v600 = vadd.f32 %v404, %v599
    %v601 = vpop.f32.mrb[0].mxu0
    %v602 = vadd.f32 %v408, %v601
    %603 = vmatprep.mubr.bf16.mxu0 0
    %604 = vmatmul.mubr.bf16.gmra.mrb[0].mxu0 %v375
    %v605 = vpop.f32.mrb[0].mxu0
    %v606 = vadd.f32 %v404, %v605
    %v607 = vpop.f32.mrb[0].mxu0
    %v608 = vadd.f32 %v408, %v607
    %v609 = vpop.f32.mrb[0].mxu0
    %v610 = vadd.f32 %v404, %v609
    %v611 = vpop.f32.mrb[0].mxu0
    %v612 = vadd.f32 %v408, %v611
    %613 = vmatprep.mubr.bf16.mxu0 0
    %614 = vmatmul.mubr.bf16.gmra.mrb[0].mxu0 %v376
    %v615 = vpop.f32.mrb[0].mxu0
    %v616 = vadd.f32 %v404, %v615
    %v617 = vpop.f32.mrb[0].mxu0
    %v618 = vadd.f32 %v408, %v617
    %v619 = vpop.f32.mrb[0].mxu0
    %v620 = vadd.f32 %v404, %v619
    %v621 = vpop.f32.mrb[0].mxu0
    %v622 = vadd.f32 %v408, %v621
    %623 = vmatprep.mubr.bf16.mxu0 0
    %624 = vmatmul.mubr.bf16.gmra.mrb[0].mxu0 %v377
    %v625 = vpop.f32.mrb[0].mxu0
    %v626 = vadd.f32 %v404, %v625
    %v627 = vpop.f32.mrb[0].mxu0
    %v628 = vadd.f32 %v408, %v627
    %v629 = vpop.f32.mrb[0].mxu0
    %v630 = vadd.f32 %v404, %v629
    %v631 = vpop.f32.mrb[0].mxu0
    %v632 = vadd.f32 %v408, %v631
    %633 = vmatprep.mubr.bf16.mxu0 0
    %634 = vmatmul.mubr.bf16.gmra.mrb[0].mxu0 %v378
    %v635 = vpop.f32.mrb[0].mxu0
    %v636 = vadd.f32 %v404, %v635
    %v637 = vpop.f32.mrb[0].mxu0
    %v638 = vadd.f32 %v408, %v637
    %v639 = vpop.f32.mrb[0].mxu0
    %v640 = vadd.f32 %v404, %v639
    %v641 = vpop.f32.mrb[0].mxu0
    %v642 = vadd.f32 %v408, %v641
    %643 = vmatprep.mubr.bf16.mxu0 0
    %644 = vmatmul.mubr.bf16.gmra.mrb[0].mxu0 %v379
    %v645 = vpop.f32.mrb[0].mxu0
    %v646 = vadd.f32 %v404, %v645
    %v647 = vpop.f32.mrb[0].mxu0
    %v648 = vadd.f32 %v408, %v647
    %v649 = vpop.f32.mrb[0].mxu0
    %v650 = vadd.f32 %v404, %v649
    %v651 = vpop.f32.mrb[0].mxu0
    %v652 = vadd.f32 %v408, %v651
    %653 = vmatprep.mubr.bf16.mxu0 0
    %654 = vmatmul.mubr.bf16.gmra.mrb[0].mxu0 %v380
    %v655 = vpop.f32.mrb[0].mxu0
    %v656 = vadd.f32 %v404, %v655
    %v657 = vpop.f32.mrb[0].mxu0
    %v658 = vadd.f32 %v408, %v657
    %v659 = vpop.f32.mrb[0].mxu0
    %v660 = vadd.f32 %v404, %v659
    %v661 = vpop.f32.mrb[0].mxu0
    %v662 = vadd.f32 %v408, %v661
    %663 = vmatprep.mubr.bf16.mxu0 0
    %664 = vmatmul.mubr.bf16.gmra.mrb[0].mxu0 %v381
    %v665 = vpop.f32.mrb[0].mxu0
    %v666 = vadd.f32 %v404, %v665
    %v667 = vpop.f32.mrb[0].mxu0
    %v668 = vadd.f32 %v408, %v667
    %v669 = vpop.f32.mrb[0].mxu0
    %v670 = vadd.f32 %v404, %v669
    %v671 = vpop.f32.mrb[0].mxu0
    %v672 = vadd.f32 %v408, %v671
    %673 = vmatprep.mubr.bf16.mxu0 0
    %674 = vmatmul.mubr.bf16.gmra.mrb[0].mxu0 %v382
    %v675 = vpop.f32.mrb[0].mxu0
    %v676 = vadd.f32 %v404, %v675
    %v677 = vpop.f32.mrb[0].mxu0
    %v678 = vadd.f32 %v408, %v677
    %v679 = vpop.f32.mrb[0].mxu0
    %v680 = vadd.f32 %v404, %v679
    %v681 = vpop.f32.mrb[0].mxu0
    %v682 = vadd.f32 %v408, %v681
    %683 = vdwg.mxu0
    %v684 = vmul.f32 %v526, 0.2
    %v685 = vmul.f32 %v528, 0.2
    %v686 = vmul.f32 %v530, 0.2
    %v687 = vmul.f32 %v532, 0.2
    %v688 = vmul.f32 %v536, 0.2
    %v689 = vmul.f32 %v538, 0.2
    %v690 = vmul.f32 %v540, 0.2
    %v691 = vmul.f32 %v542, 0.2
    %v692 = vmul.f32 %v546, 0.2
    %v693 = vmul.f32 %v548, 0.2
    %v694 = vmul.f32 %v550, 0.2
    %v695 = vmul.f32 %v552, 0.2
    %v696 = vmul.f32 %v556, 0.2
    %v697 = vmul.f32 %v558, 0.2
    %v698 = vmul.f32 %v560, 0.2
    %v699 = vmul.f32 %v562, 0.2
    %v700 = vmul.f32 %v566, 0.2
    %v701 = vmul.f32 %v568, 0.2
    %v702 = vmul.f32 %v570, 0.2
    %v703 = vmul.f32 %v572, 0.2
    %v704 = vmul.f32 %v576, 0.2
    %v705 = vmul.f32 %v578, 0.2
    %v706 = vmul.f32 %v580, 0.2
    %v707 = vmul.f32 %v582, 0.2
    %v708 = vmul.f32 %v586, 0.2
    %v709 = vmul.f32 %v588, 0.2
    %v710 = vmul.f32 %v590, 0.2
    %v711 = vmul.f32 %v592, 0.2
    %v712 = vmul.f32 %v596, 0.2
    %v713 = vmul.f32 %v598, 0.2
    %v714 = vmul.f32 %v600, 0.2
    %v715 = vmul.f32 %v602, 0.2
    %v716 = vmul.f32 %v606, 0.2
    %v717 = vmul.f32 %v608, 0.2
    %v718 = vmul.f32 %v610, 0.2
    %v719 = vmul.f32 %v612, 0.2
    %v720 = vmul.f32 %v616, 0.2
    %v721 = vmul.f32 %v618, 0.2
    %v722 = vmul.f32 %v620, 0.2
    %v723 = vmul.f32 %v622, 0.2
    %v724 = vmul.f32 %v626, 0.2
    %v725 = vmul.f32 %v628, 0.2
    %v726 = vmul.f32 %v630, 0.2
    %v727 = vmul.f32 %v632, 0.2
    %v728 = vmul.f32 %v636, 0.2
    %v729 = vmul.f32 %v638, 0.2
    %v730 = vmul.f32 %v640, 0.2
    %v731 = vmul.f32 %v642, 0.2
    %v732 = vmul.f32 %v646, 0.2
    %v733 = vmul.f32 %v648, 0.2
    %v734 = vmul.f32 %v650, 0.2
    %v735 = vmul.f32 %v652, 0.2
    %v736 = vmul.f32 %v656, 0.2
    %v737 = vmul.f32 %v658, 0.2
    %v738 = vmul.f32 %v660, 0.2
    %v739 = vmul.f32 %v662, 0.2
    %v740 = vmul.f32 %v666, 0.2
    %v741 = vmul.f32 %v668, 0.2
    %v742 = vmul.f32 %v670, 0.2
    %v743 = vmul.f32 %v672, 0.2
    %v744 = vmul.f32 %v676, 0.2
    %v745 = vmul.f32 %v678, 0.2
    %v746 = vmul.f32 %v680, 0.2
    %v747 = vmul.f32 %v682, 0.2
    %v748 = vmax.f32 %v526, %v684
    %v749 = vmax.f32 %v528, %v685
    %v750 = vmax.f32 %v530, %v686
    %v751 = vmax.f32 %v532, %v687
    %v752 = vmax.f32 %v536, %v688
    %v753 = vmax.f32 %v538, %v689
    %v754 = vmax.f32 %v540, %v690
    %v755 = vmax.f32 %v542, %v691
    %v756 = vmax.f32 %v546, %v692
    %v757 = vmax.f32 %v548, %v693
    %v758 = vmax.f32 %v550, %v694
    %v759 = vmax.f32 %v552, %v695
    %v760 = vmax.f32 %v556, %v696
    %v761 = vmax.f32 %v558, %v697
    %v762 = vmax.f32 %v560, %v698
    %v763 = vmax.f32 %v562, %v699
    %v764 = vmax.f32 %v566, %v700
    %v765 = vmax.f32 %v568, %v701
    %v766 = vmax.f32 %v570, %v702
    %v767 = vmax.f32 %v572, %v703
    %v768 = vmax.f32 %v576, %v704
    %v769 = vmax.f32 %v578, %v705
    %v770 = vmax.f32 %v580, %v706
    %v771 = vmax.f32 %v582, %v707
    %v772 = vmax.f32 %v586, %v708
    %v773 = vmax.f32 %v588, %v709
    %v774 = vmax.f32 %v590, %v710
    %v775 = vmax.f32 %v592, %v711
    %v776 = vmax.f32 %v596, %v712
    %v777 = vmax.f32 %v598, %v713
    %v778 = vmax.f32 %v600, %v714
    %v779 = vmax.f32 %v602, %v715
    %v780 = vmax.f32 %v606, %v716
    %v781 = vmax.f32 %v608, %v717
    %v782 = vmax.f32 %v610, %v718
    %v783 = vmax.f32 %v612, %v719
    %v784 = vmax.f32 %v616, %v720
    %v785 = vmax.f32 %v618, %v721
    %v786 = vmax.f32 %v620, %v722
    %v787 = vmax.f32 %v622, %v723
    %v788 = vmax.f32 %v626, %v724
    %v789 = vmax.f32 %v628, %v725
    %v790 = vmax.f32 %v630, %v726
    %v791 = vmax.f32 %v632, %v727
    %v792 = vmax.f32 %v636, %v728
    %v793 = vmax.f32 %v638, %v729
    %v794 = vmax.f32 %v640, %v730
    %v795 = vmax.f32 %v642, %v731
    %v796 = vmax.f32 %v646, %v732
    %v797 = vmax.f32 %v648, %v733
    %v798 = vmax.f32 %v650, %v734
    %v799 = vmax.f32 %v652, %v735
    %v800 = vmax.f32 %v656, %v736
    %v801 = vmax.f32 %v658, %v737
    %v802 = vmax.f32 %v660, %v738
    %v803 = vmax.f32 %v662, %v739
    %v804 = vmax.f32 %v666, %v740
    %v805 = vmax.f32 %v668, %v741
    %v806 = vmax.f32 %v670, %v742
    %v807 = vmax.f32 %v672, %v743
    %v808 = vmax.f32 %v676, %v744
    %v809 = vmax.f32 %v678, %v745
    %v810 = vmax.f32 %v680, %v746
    %v811 = vmax.f32 %v682, %v747
    %v812 = vpack.c.bf16 %v750, %v748
    %v813 = vpack.c.bf16 %v751, %v749
    %v814 = vpack.c.bf16 %v754, %v752
    %v815 = vpack.c.bf16 %v755, %v753
    %v816 = vpack.c.bf16 %v758, %v756
    %v817 = vpack.c.bf16 %v759, %v757
    %v818 = vpack.c.bf16 %v762, %v760
    %v819 = vpack.c.bf16 %v763, %v761
    %v820 = vpack.c.bf16 %v766, %v764
    %v821 = vpack.c.bf16 %v767, %v765
    %v822 = vpack.c.bf16 %v770, %v768
    %v823 = vpack.c.bf16 %v771, %v769
    %v824 = vpack.c.bf16 %v774, %v772
    %v825 = vpack.c.bf16 %v775, %v773
    %v826 = vpack.c.bf16 %v778, %v776
    %v827 = vpack.c.bf16 %v779, %v777
    %v828 = vpack.c.bf16 %v782, %v780
    %v829 = vpack.c.bf16 %v783, %v781
    %v830 = vpack.c.bf16 %v786, %v784
    %v831 = vpack.c.bf16 %v787, %v785
    %v832 = vpack.c.bf16 %v790, %v788
    %v833 = vpack.c.bf16 %v791, %v789
    %v834 = vpack.c.bf16 %v794, %v792
    %v835 = vpack.c.bf16 %v795, %v793
    %v836 = vpack.c.bf16 %v798, %v796
    %v837 = vpack.c.bf16 %v799, %v797
    %v838 = vpack.c.bf16 %v802, %v800
    %v839 = vpack.c.bf16 %v803, %v801
    %v840 = vpack.c.bf16 %v806, %v804
    %v841 = vpack.c.bf16 %v807, %v805
    %v842 = vpack.c.bf16 %v810, %v808
    %v843 = vpack.c.bf16 %v811, %v809
    %v844 = vld [vmem:[%s5] sm:$0xf]
    %v845 = vld [vmem:[%s5 + $0x4] sm:$0xf]
    %v846 = vld [vmem:[%s5 + $0x8] sm:$0xf]
    %v847 = vld [vmem:[%s5 + $0xc] sm:$0xf]
    %v848 = vld [vmem:[%s5 + $0x10] sm:$0xf]
    %v849 = vld [vmem:[%s5 + $0x14] sm:$0xf]
    %v850 = vld [vmem:[%s5 + $0x18] sm:$0xf]
    %v851 = vld [vmem:[%s5 + $0x1c] sm:$0xf]
    %v852 = vld [vmem:[%s5 + $0x20] sm:$0xf]
    %v853 = vld [vmem:[%s5 + $0x24] sm:$0xf]
    %v854 = vld [vmem:[%s5 + $0x28] sm:$0xf]
    %v855 = vld [vmem:[%s5 + $0x2c] sm:$0xf]
    %v856 = vld [vmem:[%s5 + $0x30] sm:$0xf]
    %v857 = vld [vmem:[%s5 + $0x34] sm:$0xf]
    %v858 = vld [vmem:[%s5 + $0x38] sm:$0xf]
    %v859 = vld [vmem:[%s5 + $0x3c] sm:$0xf]
    %v860 = vld [vmem:[%s5 + $0x40] sm:$0xf]
    %v861 = vld [vmem:[%s5 + $0x44] sm:$0xf]
    %v862 = vld [vmem:[%s5 + $0x48] sm:$0xf]
    %v863 = vld [vmem:[%s5 + $0x4c] sm:$0xf]
    %v864 = vld [vmem:[%s5 + $0x50] sm:$0xf]
    %v865 = vld [vmem:[%s5 + $0x54] sm:$0xf]
    %v866 = vld [vmem:[%s5 + $0x58] sm:$0xf]
    %v867 = vld [vmem:[%s5 + $0x5c] sm:$0xf]
    %v868 = vld [vmem:[%s5 + $0x60] sm:$0xf]
    %v869 = vld [vmem:[%s5 + $0x64] sm:$0xf]
    %v870 = vld [vmem:[%s5 + $0x68] sm:$0xf]
    %v871 = vld [vmem:[%s5 + $0x6c] sm:$0xf]
    %v872 = vld [vmem:[%s5 + $0x70] sm:$0xf]
    %v873 = vld [vmem:[%s5 + $0x74] sm:$0xf]
    %v874 = vld [vmem:[%s5 + $0x78] sm:$0xf]
    %v875 = vld [vmem:[%s5 + $0x7c] sm:$0xf]
    %v876 = vld [vmem:[%s6] sm:$0x1]
    %v878 = vlaneseq
    %v879 = vshrl.u32 %v878, 7
    %v880 = vsub.s32 0, %v879
    %v881 = vrot.slane %v876, %v880
    %v915 = vunpack.c.l.b16 %v844
    %v916 = vunpack.c.l.b16 %v845
    %v917 = vunpack.c.l.b16 %v846
    %v918 = vunpack.c.l.b16 %v847
    %v919 = vunpack.c.l.b16 %v848
    %v920 = vunpack.c.l.b16 %v849
    %v921 = vunpack.c.l.b16 %v850
    %v922 = vunpack.c.l.b16 %v851
    %v923 = vunpack.c.l.b16 %v852
    %v924 = vunpack.c.l.b16 %v853
    %v925 = vunpack.c.l.b16 %v854
    %v926 = vunpack.c.l.b16 %v855
    %v927 = vunpack.c.l.b16 %v856
    %v928 = vunpack.c.l.b16 %v857
    %v929 = vunpack.c.l.b16 %v858
    %v930 = vunpack.c.l.b16 %v859
    %v931 = vunpack.c.l.b16 %v860
    %v932 = vunpack.c.l.b16 %v861
    %v933 = vunpack.c.l.b16 %v862
    %v934 = vunpack.c.l.b16 %v863
    %v935 = vunpack.c.l.b16 %v864
    %v936 = vunpack.c.l.b16 %v865
    %v937 = vunpack.c.l.b16 %v866
    %v938 = vunpack.c.l.b16 %v867
    %v939 = vunpack.c.l.b16 %v868
    %v940 = vunpack.c.l.b16 %v869
    %v941 = vunpack.c.l.b16 %v870
    %v942 = vunpack.c.l.b16 %v871
    %v943 = vunpack.c.l.b16 %v872
    %v944 = vunpack.c.l.b16 %v873
    %v945 = vunpack.c.l.b16 %v874
    %v946 = vunpack.c.l.b16 %v875
    %v947 = vpack.c.b16 %v916, %v915
    %v948 = vpack.c.b16 %v918, %v917
    %v949 = vpack.c.b16 %v920, %v919
    %v950 = vpack.c.b16 %v922, %v921
    %v951 = vpack.c.b16 %v924, %v923
    %v952 = vpack.c.b16 %v926, %v925
    %v953 = vpack.c.b16 %v928, %v927
    %v954 = vpack.c.b16 %v930, %v929
    %v955 = vpack.c.b16 %v932, %v931
    %v956 = vpack.c.b16 %v934, %v933
    %v957 = vpack.c.b16 %v936, %v935
    %v958 = vpack.c.b16 %v938, %v937
    %v959 = vpack.c.b16 %v940, %v939
    %v960 = vpack.c.b16 %v942, %v941
    %v961 = vpack.c.b16 %v944, %v943
    %v962 = vpack.c.b16 %v946, %v945
    %979 = vmatprep.subr.bf16.mxu0 0
    %980 = vmatpush1.bf16.msra.mxu0 %v947
    %981 = vmatprep.subr.bf16.mxu0 0
    %982 = vmatpush1.bf16.msra.mxu0 %v948
    %983 = vmatprep.subr.bf16.mxu0 0
    %984 = vmatpush1.bf16.msra.mxu0 %v949
    %985 = vmatprep.subr.bf16.mxu0 0
    %986 = vmatpush1.bf16.msra.mxu0 %v950
    %987 = vmatprep.subr.bf16.mxu0 0
    %988 = vmatpush1.bf16.msra.mxu0 %v951
    %989 = vmatprep.subr.bf16.mxu0 0
    %990 = vmatpush1.bf16.msra.mxu0 %v952
    %991 = vmatprep.subr.bf16.mxu0 0
    %992 = vmatpush1.bf16.msra.mxu0 %v953
    %993 = vmatprep.subr.bf16.mxu0 0
    %994 = vmatpush1.bf16.msra.mxu0 %v954
    %995 = vmatprep.subr.bf16.mxu0 0
    %996 = vmatpush1.bf16.msra.mxu0 %v955
    %997 = vmatprep.subr.bf16.mxu0 0
    %998 = vmatpush1.bf16.msra.mxu0 %v956
    %999 = vmatprep.subr.bf16.mxu0 0
    %1000 = vmatpush1.bf16.msra.mxu0 %v957
    %1001 = vmatprep.subr.bf16.mxu0 0
    %1002 = vmatpush1.bf16.msra.mxu0 %v958
    %1003 = vmatprep.subr.bf16.mxu0 0
    %1004 = vmatpush1.bf16.msra.mxu0 %v959
    %1005 = vmatprep.subr.bf16.mxu0 0
    %1006 = vmatpush1.bf16.msra.mxu0 %v960
    %1007 = vmatprep.subr.bf16.mxu0 0
    %1008 = vmatpush1.bf16.msra.mxu0 %v961
    %1009 = vmatprep.subr.bf16.mxu0 0
    %1010 = vmatpush1.bf16.msra.mxu0 %v962
    %1011 = vmatprep.mubr.bf16.mxu0 %v813
    %1012 = vmatmul.mubr.bf16.gmra.mrb[0].mxu0 %v812
    %v1013 = vpop.f32.mrb[0].mxu0
    %v1014 = vadd.f32 %v881, %v1013
    %v1015 = vpop.f32.mrb[0].mxu0
    %v1016 = vpop.f32.mrb[0].mxu0
    %v1017 = vadd.f32 %v881, %v1016
    %v1018 = vpop.f32.mrb[0].mxu0
    %1019 = vmatprep.mubr.bf16.mxu0 %v815
    %1020 = vmatmul.mubr.bf16.gmra.mrb[0].mxu0 %v814
    %v1021 = vpop.f32.mrb[0].mxu0
    %v1022 = vadd.f32 %v881, %v1021
    %v1023 = vpop.f32.mrb[0].mxu0
    %v1024 = vpop.f32.mrb[0].mxu0
    %v1025 = vadd.f32 %v881, %v1024
    %v1026 = vpop.f32.mrb[0].mxu0
    %1027 = vmatprep.mubr.bf16.mxu0 %v817
    %1028 = vmatmul.mubr.bf16.gmra.mrb[0].mxu0 %v816
    %v1029 = vpop.f32.mrb[0].mxu0
    %v1030 = vadd.f32 %v881, %v1029
    %v1031 = vpop.f32.mrb[0].mxu0
    %v1032 = vpop.f32.mrb[0].mxu0
    %v1033 = vadd.f32 %v881, %v1032
    %v1034 = vpop.f32.mrb[0].mxu0
    %1035 = vmatprep.mubr.bf16.mxu0 %v819
    %1036 = vmatmul.mubr.bf16.gmra.mrb[0].mxu0 %v818
    %v1037 = vpop.f32.mrb[0].mxu0
    %v1038 = vadd.f32 %v881, %v1037
    %v1039 = vpop.f32.mrb[0].mxu0
    %v1040 = vpop.f32.mrb[0].mxu0
    %v1041 = vadd.f32 %v881, %v1040
    %v1042 = vpop.f32.mrb[0].mxu0
    %1043 = vmatprep.mubr.bf16.mxu0 %v821
    %1044 = vmatmul.mubr.bf16.gmra.mrb[0].mxu0 %v820
    %v1045 = vpop.f32.mrb[0].mxu0
    %v1046 = vadd.f32 %v881, %v1045
    %v1047 = vpop.f32.mrb[0].mxu0
    %v1048 = vpop.f32.mrb[0].mxu0
    %v1049 = vadd.f32 %v881, %v1048
    %v1050 = vpop.f32.mrb[0].mxu0
    %1051 = vmatprep.mubr.bf16.mxu0 %v823
    %1052 = vmatmul.mubr.bf16.gmra.mrb[0].mxu0 %v822
    %v1053 = vpop.f32.mrb[0].mxu0
    %v1054 = vadd.f32 %v881, %v1053
    %v1055 = vpop.f32.mrb[0].mxu0
    %v1056 = vpop.f32.mrb[0].mxu0
    %v1057 = vadd.f32 %v881, %v1056
    %v1058 = vpop.f32.mrb[0].mxu0
    %1059 = vmatprep.mubr.bf16.mxu0 %v825
    %1060 = vmatmul.mubr.bf16.gmra.mrb[0].mxu0 %v824
    %v1061 = vpop.f32.mrb[0].mxu0
    %v1062 = vadd.f32 %v881, %v1061
    %v1063 = vpop.f32.mrb[0].mxu0
    %v1064 = vpop.f32.mrb[0].mxu0
    %v1065 = vadd.f32 %v881, %v1064
    %v1066 = vpop.f32.mrb[0].mxu0
    %1067 = vmatprep.mubr.bf16.mxu0 %v827
    %1068 = vmatmul.mubr.bf16.gmra.mrb[0].mxu0 %v826
    %v1069 = vpop.f32.mrb[0].mxu0
    %v1070 = vadd.f32 %v881, %v1069
    %v1071 = vpop.f32.mrb[0].mxu0
    %v1072 = vpop.f32.mrb[0].mxu0
    %v1073 = vadd.f32 %v881, %v1072
    %v1074 = vpop.f32.mrb[0].mxu0
    %1075 = vmatprep.mubr.bf16.mxu0 %v829
    %1076 = vmatmul.mubr.bf16.gmra.mrb[0].mxu0 %v828
    %v1077 = vpop.f32.mrb[0].mxu0
    %v1078 = vadd.f32 %v881, %v1077
    %v1079 = vpop.f32.mrb[0].mxu0
    %v1080 = vpop.f32.mrb[0].mxu0
    %v1081 = vadd.f32 %v881, %v1080
    %v1082 = vpop.f32.mrb[0].mxu0
    %1083 = vmatprep.mubr.bf16.mxu0 %v831
    %1084 = vmatmul.mubr.bf16.gmra.mrb[0].mxu0 %v830
    %v1085 = vpop.f32.mrb[0].mxu0
    %v1086 = vadd.f32 %v881, %v1085
    %v1087 = vpop.f32.mrb[0].mxu0
    %v1088 = vpop.f32.mrb[0].mxu0
    %v1089 = vadd.f32 %v881, %v1088
    %v1090 = vpop.f32.mrb[0].mxu0
    %1091 = vmatprep.mubr.bf16.mxu0 %v833
    %1092 = vmatmul.mubr.bf16.gmra.mrb[0].mxu0 %v832
    %v1093 = vpop.f32.mrb[0].mxu0
    %v1094 = vadd.f32 %v881, %v1093
    %v1095 = vpop.f32.mrb[0].mxu0
    %v1096 = vpop.f32.mrb[0].mxu0
    %v1097 = vadd.f32 %v881, %v1096
    %v1098 = vpop.f32.mrb[0].mxu0
    %1099 = vmatprep.mubr.bf16.mxu0 %v835
    %1100 = vmatmul.mubr.bf16.gmra.mrb[0].mxu0 %v834
    %v1101 = vpop.f32.mrb[0].mxu0
    %v1102 = vadd.f32 %v881, %v1101
    %v1103 = vpop.f32.mrb[0].mxu0
    %v1104 = vpop.f32.mrb[0].mxu0
    %v1105 = vadd.f32 %v881, %v1104
    %v1106 = vpop.f32.mrb[0].mxu0
    %1107 = vmatprep.mubr.bf16.mxu0 %v837
    %1108 = vmatmul.mubr.bf16.gmra.mrb[0].mxu0 %v836
    %v1109 = vpop.f32.mrb[0].mxu0
    %v1110 = vadd.f32 %v881, %v1109
    %v1111 = vpop.f32.mrb[0].mxu0
    %v1112 = vpop.f32.mrb[0].mxu0
    %v1113 = vadd.f32 %v881, %v1112
    %v1114 = vpop.f32.mrb[0].mxu0
    %1115 = vmatprep.mubr.bf16.mxu0 %v839
    %1116 = vmatmul.mubr.bf16.gmra.mrb[0].mxu0 %v838
    %v1117 = vpop.f32.mrb[0].mxu0
    %v1118 = vadd.f32 %v881, %v1117
    %v1119 = vpop.f32.mrb[0].mxu0
    %v1120 = vpop.f32.mrb[0].mxu0
    %v1121 = vadd.f32 %v881, %v1120
    %v1122 = vpop.f32.mrb[0].mxu0
    %1123 = vmatprep.mubr.bf16.mxu0 %v841
    %1124 = vmatmul.mubr.bf16.gmra.mrb[0].mxu0 %v840
    %v1125 = vpop.f32.mrb[0].mxu0
    %v1126 = vadd.f32 %v881, %v1125
    %v1127 = vpop.f32.mrb[0].mxu0
    %v1128 = vpop.f32.mrb[0].mxu0
    %v1129 = vadd.f32 %v881, %v1128
    %v1130 = vpop.f32.mrb[0].mxu0
    %1131 = vmatprep.mubr.bf16.mxu0 %v843
    %1132 = vmatmul.mubr.bf16.gmra.mrb[0].mxu0 %v842
    %v1133 = vpop.f32.mrb[0].mxu0
    %v1134 = vadd.f32 %v881, %v1133
    %v1135 = vpop.f32.mrb[0].mxu0
    %v1136 = vpop.f32.mrb[0].mxu0
    %v1137 = vadd.f32 %v881, %v1136
    %v1138 = vpop.f32.mrb[0].mxu0
    %1139 = vdwg.mxu0
    %vm1140 = vcmask 15360
    %1141 = vst.msk [vmem:[#allocation2] sm:$0xff] %vm1140, %v1014
    %1142 = vst.msk [vmem:[#allocation2 + $0x8] sm:$0xff] %vm1140, %v1017
    %1143 = vst.msk [vmem:[#allocation2 + $0x10] sm:$0xff] %vm1140, %v1022
    %1144 = vst.msk [vmem:[#allocation2 + $0x18] sm:$0xff] %vm1140, %v1025
    %1145 = vst.msk [vmem:[#allocation2 + $0x20] sm:$0xff] %vm1140, %v1030
    %1146 = vst.msk [vmem:[#allocation2 + $0x28] sm:$0xff] %vm1140, %v1033
    %1147 = vst.msk [vmem:[#allocation2 + $0x30] sm:$0xff] %vm1140, %v1038
    %1148 = vst.msk [vmem:[#allocation2 + $0x38] sm:$0xff] %vm1140, %v1041
    %1149 = vst.msk [vmem:[#allocation2 + $0x40] sm:$0xff] %vm1140, %v1046
    %1150 = vst.msk [vmem:[#allocation2 + $0x48] sm:$0xff] %vm1140, %v1049
    %1151 = vst.msk [vmem:[#allocation2 + $0x50] sm:$0xff] %vm1140, %v1054
    %1152 = vst.msk [vmem:[#allocation2 + $0x58] sm:$0xff] %vm1140, %v1057
    %1153 = vst.msk [vmem:[#allocation2 + $0x60] sm:$0xff] %vm1140, %v1062
    %1154 = vst.msk [vmem:[#allocation2 + $0x68] sm:$0xff] %vm1140, %v1065
    %1155 = vst.msk [vmem:[#allocation2 + $0x70] sm:$0xff] %vm1140, %v1070
    %1156 = vst.msk [vmem:[#allocation2 + $0x78] sm:$0xff] %vm1140, %v1073
    %1157 = vst.msk [vmem:[#allocation2 + $0x80] sm:$0xff] %vm1140, %v1078
    %1158 = vst.msk [vmem:[#allocation2 + $0x88] sm:$0xff] %vm1140, %v1081
    %1159 = vst.msk [vmem:[#allocation2 + $0x90] sm:$0xff] %vm1140, %v1086
    %1160 = vst.msk [vmem:[#allocation2 + $0x98] sm:$0xff] %vm1140, %v1089
    %1161 = vst.msk [vmem:[#allocation2 + $0xa0] sm:$0xff] %vm1140, %v1094
    %1162 = vst.msk [vmem:[#allocation2 + $0xa8] sm:$0xff] %vm1140, %v1097
    %1163 = vst.msk [vmem:[#allocation2 + $0xb0] sm:$0xff] %vm1140, %v1102
    %1164 = vst.msk [vmem:[#allocation2 + $0xb8] sm:$0xff] %vm1140, %v1105
    %1165 = vst.msk [vmem:[#allocation2 + $0xc0] sm:$0xff] %vm1140, %v1110
    %1166 = vst.msk [vmem:[#allocation2 + $0xc8] sm:$0xff] %vm1140, %v1113
    %1167 = vst.msk [vmem:[#allocation2 + $0xd0] sm:$0xff] %vm1140, %v1118
    %1168 = vst.msk [vmem:[#allocation2 + $0xd8] sm:$0xff] %vm1140, %v1121
    %1169 = vst.msk [vmem:[#allocation2 + $0xe0] sm:$0xff] %vm1140, %v1126
    %1170 = vst.msk [vmem:[#allocation2 + $0xe8] sm:$0xff] %vm1140, %v1129
    %1171 = vst.msk [vmem:[#allocation2 + $0xf0] sm:$0xff] %vm1140, %v1134
    %1172 = vst.msk [vmem:[#allocation2 + $0xf8] sm:$0xff] %vm1140, %v1137
    // Predicated region
    $region30: #{generator_forward.1} parent=1 // pred_check
      _
    $region31: #{generator_forward.1} parent=1 // pred_check_branch
      %1174 = sbr.rel (0) target = $region33
    $region32: #{generator_forward.1} parent=1 // pred_region
      // Predicated region
      $region34: #{generator_forward.1} parent=32 // pred_check
        _
      $region35: #{generator_forward.1} parent=32 // pred_check_branch
        %1176 = sbr.rel (0) target = $region37
      $region36: #{generator_forward.1} parent=32 // pred_region
        // Predicated region
        $region38: #{generator_forward.1} parent=36 // pred_check
          _
        $region39: #{generator_forward.1} parent=36 // pred_check_branch
          %1178 = sbr.rel (0) target = $region41
        $region40: #{generator_forward.1} parent=36 // pred_region
          // Predicated region
          $region53: #{generator_forward.1} parent=40 // pred_check
            _
          $region54: #{generator_forward.1} parent=40 // pred_check_branch
            %1241 = sbr.rel (0) target = $region56
          $region55: #{generator_forward.1} parent=40 // pred_region
            loop: start=0, step=1, limit=1
            $region57: #{generator_forward.1} parent=55 // loop_pre_header
              _
            $region58: #{generator_forward.1} parent=55 // loop_header
              %s1243 = sphi 0, %s1247
              %p1244 = scmp.ge.s32.totalorder %s1243, 1
              %s1248 = sphi [#allocation2], [#allocation2]
              %s1249 = sphi %s7, %s7
            $region59: #{generator_forward.1} parent=55 // loop_header_branch
              %1246 = sbr.rel (%p1244) target = $region63
            $region60: #{generator_forward.1} parent=55 // loop_body
              %v1250 = vld [vmem:[%s1248] sm:$0xff]
              %1251 = vst [vmem:[%s1249] sm:$0xff] %v1250
              %v1252 = vld [vmem:[%s1248 + $0x8] sm:$0xff]
              %1253 = vst [vmem:[%s1249 + $0x8] sm:$0xff] %v1252
              %v1254 = vld [vmem:[%s1248 + $0x10] sm:$0xff]
              %1255 = vst [vmem:[%s1249 + $0x10] sm:$0xff] %v1254
              %v1256 = vld [vmem:[%s1248 + $0x18] sm:$0xff]
              %1257 = vst [vmem:[%s1249 + $0x18] sm:$0xff] %v1256
              %v1258 = vld [vmem:[%s1248 + $0x20] sm:$0xff]
              %1259 = vst [vmem:[%s1249 + $0x20] sm:$0xff] %v1258
              %v1260 = vld [vmem:[%s1248 + $0x28] sm:$0xff]
              %1261 = vst [vmem:[%s1249 + $0x28] sm:$0xff] %v1260
              %v1262 = vld [vmem:[%s1248 + $0x30] sm:$0xff]
              %1263 = vst [vmem:[%s1249 + $0x30] sm:$0xff] %v1262
              %v1264 = vld [vmem:[%s1248 + $0x38] sm:$0xff]
              %1265 = vst [vmem:[%s1249 + $0x38] sm:$0xff] %v1264
              %v1266 = vld [vmem:[%s1248 + $0x40] sm:$0xff]
              %1267 = vst [vmem:[%s1249 + $0x40] sm:$0xff] %v1266
              %v1268 = vld [vmem:[%s1248 + $0x48] sm:$0xff]
              %1269 = vst [vmem:[%s1249 + $0x48] sm:$0xff] %v1268
              %v1270 = vld [vmem:[%s1248 + $0x50] sm:$0xff]
              %1271 = vst [vmem:[%s1249 + $0x50] sm:$0xff] %v1270
              %v1272 = vld [vmem:[%s1248 + $0x58] sm:$0xff]
              %1273 = vst [vmem:[%s1249 + $0x58] sm:$0xff] %v1272
              %v1274 = vld [vmem:[%s1248 + $0x60] sm:$0xff]
              %1275 = vst [vmem:[%s1249 + $0x60] sm:$0xff] %v1274
              %v1276 = vld [vmem:[%s1248 + $0x68] sm:$0xff]
              %1277 = vst [vmem:[%s1249 + $0x68] sm:$0xff] %v1276
              %v1278 = vld [vmem:[%s1248 + $0x70] sm:$0xff]
              %1279 = vst [vmem:[%s1249 + $0x70] sm:$0xff] %v1278
              %v1280 = vld [vmem:[%s1248 + $0x78] sm:$0xff]
              %1281 = vst [vmem:[%s1249 + $0x78] sm:$0xff] %v1280
              %v1282 = vld [vmem:[%s1248 + $0x80] sm:$0xff]
              %1283 = vst [vmem:[%s1249 + $0x80] sm:$0xff] %v1282
              %v1284 = vld [vmem:[%s1248 + $0x88] sm:$0xff]
              %1285 = vst [vmem:[%s1249 + $0x88] sm:$0xff] %v1284
              %v1286 = vld [vmem:[%s1248 + $0x90] sm:$0xff]
              %1287 = vst [vmem:[%s1249 + $0x90] sm:$0xff] %v1286
              %v1288 = vld [vmem:[%s1248 + $0x98] sm:$0xff]
              %1289 = vst [vmem:[%s1249 + $0x98] sm:$0xff] %v1288
              %v1290 = vld [vmem:[%s1248 + $0xa0] sm:$0xff]
              %1291 = vst [vmem:[%s1249 + $0xa0] sm:$0xff] %v1290
              %v1292 = vld [vmem:[%s1248 + $0xa8] sm:$0xff]
              %1293 = vst [vmem:[%s1249 + $0xa8] sm:$0xff] %v1292
              %v1294 = vld [vmem:[%s1248 + $0xb0] sm:$0xff]
              %1295 = vst [vmem:[%s1249 + $0xb0] sm:$0xff] %v1294
              %v1296 = vld [vmem:[%s1248 + $0xb8] sm:$0xff]
              %1297 = vst [vmem:[%s1249 + $0xb8] sm:$0xff] %v1296
              %v1298 = vld [vmem:[%s1248 + $0xc0] sm:$0xff]
              %1299 = vst [vmem:[%s1249 + $0xc0] sm:$0xff] %v1298
            $region61: #{generator_forward.1} parent=55 // loop_footer
              %s1247 = sadd.s32 1, %s1243
            $region62: #{generator_forward.1} parent=55 // loop_footer_branch
              %1242 = sbr.rel target = $region58
            $region63: #{generator_forward.1} parent=55 // loop_exit
              _
          $region56: #{generator_forward.1} parent=40 // pred_fallthru
            _
          // Predicated region
          $region64: #{generator_forward.1} parent=40 // pred_check
            _
          $region65: #{generator_forward.1} parent=40 // pred_check_branch
            %1301 = sbr.rel target = $region67
          $region66: #{generator_forward.1} parent=40 // pred_region
            _
          $region67: #{generator_forward.1} parent=40 // pred_fallthru
            _
        $region41: #{generator_forward.1} parent=36 // pred_fallthru
          _
        // Predicated region
        $region42: #{generator_forward.1} parent=36 // pred_check
          _
        $region43: #{generator_forward.1} parent=36 // pred_check_branch
          %1180 = sbr.rel target = $region45
        $region44: #{generator_forward.1} parent=36 // pred_region
          loop: start=0, step=1, limit=1
          $region46: #{generator_forward.1} parent=44 // loop_pre_header
            _
          $region47: #{generator_forward.1} parent=44 // loop_header
            %s1183 = sphi 0, %s1187
            %p1184 = scmp.ge.s32.totalorder %s1183, 1
            %s1188 = sphi [#allocation2], [#allocation2]
            %s1189 = sphi %s7, %s7
          $region48: #{generator_forward.1} parent=44 // loop_header_branch
            %1186 = sbr.rel (%p1184) target = $region52
          $region49: #{generator_forward.1} parent=44 // loop_body
            %v1190 = vld [vmem:[%s1188] sm:$0xff]
            %1191 = vst [vmem:[%s1189] sm:$0xff] %v1190
            %v1192 = vld [vmem:[%s1188 + $0x8] sm:$0xff]
            %1193 = vst [vmem:[%s1189 + $0x8] sm:$0xff] %v1192
            %v1194 = vld [vmem:[%s1188 + $0x10] sm:$0xff]
            %1195 = vst [vmem:[%s1189 + $0x10] sm:$0xff] %v1194
            %v1196 = vld [vmem:[%s1188 + $0x18] sm:$0xff]
            %1197 = vst [vmem:[%s1189 + $0x18] sm:$0xff] %v1196
            %v1198 = vld [vmem:[%s1188 + $0x20] sm:$0xff]
            %1199 = vst [vmem:[%s1189 + $0x20] sm:$0xff] %v1198
            %v1200 = vld [vmem:[%s1188 + $0x28] sm:$0xff]
            %1201 = vst [vmem:[%s1189 + $0x28] sm:$0xff] %v1200
            %v1202 = vld [vmem:[%s1188 + $0x30] sm:$0xff]
            %1203 = vst [vmem:[%s1189 + $0x30] sm:$0xff] %v1202
            %v1204 = vld [vmem:[%s1188 + $0x38] sm:$0xff]
            %1205 = vst [vmem:[%s1189 + $0x38] sm:$0xff] %v1204
            %v1206 = vld [vmem:[%s1188 + $0x40] sm:$0xff]
            %1207 = vst [vmem:[%s1189 + $0x40] sm:$0xff] %v1206
            %v1208 = vld [vmem:[%s1188 + $0x48] sm:$0xff]
            %1209 = vst [vmem:[%s1189 + $0x48] sm:$0xff] %v1208
            %v1210 = vld [vmem:[%s1188 + $0x50] sm:$0xff]
            %1211 = vst [vmem:[%s1189 + $0x50] sm:$0xff] %v1210
            %v1212 = vld [vmem:[%s1188 + $0x58] sm:$0xff]
            %1213 = vst [vmem:[%s1189 + $0x58] sm:$0xff] %v1212
            %v1214 = vld [vmem:[%s1188 + $0x60] sm:$0xff]
            %1215 = vst [vmem:[%s1189 + $0x60] sm:$0xff] %v1214
            %v1216 = vld [vmem:[%s1188 + $0x68] sm:$0xff]
            %1217 = vst [vmem:[%s1189 + $0x68] sm:$0xff] %v1216
            %v1218 = vld [vmem:[%s1188 + $0x70] sm:$0xff]
            %1219 = vst [vmem:[%s1189 + $0x70] sm:$0xff] %v1218
            %v1220 = vld [vmem:[%s1188 + $0x78] sm:$0xff]
            %1221 = vst [vmem:[%s1189 + $0x78] sm:$0xff] %v1220
            %v1222 = vld [vmem:[%s1188 + $0x80] sm:$0xff]
            %1223 = vst [vmem:[%s1189 + $0x80] sm:$0xff] %v1222
            %v1224 = vld [vmem:[%s1188 + $0x88] sm:$0xff]
            %1225 = vst [vmem:[%s1189 + $0x88] sm:$0xff] %v1224
            %v1226 = vld [vmem:[%s1188 + $0x90] sm:$0xff]
            %1227 = vst [vmem:[%s1189 + $0x90] sm:$0xff] %v1226
            %v1228 = vld [vmem:[%s1188 + $0x98] sm:$0xff]
            %1229 = vst [vmem:[%s1189 + $0x98] sm:$0xff] %v1228
            %v1230 = vld [vmem:[%s1188 + $0xa0] sm:$0xff]
            %1231 = vst [vmem:[%s1189 + $0xa0] sm:$0xff] %v1230
            %v1232 = vld [vmem:[%s1188 + $0xa8] sm:$0xff]
            %1233 = vst [vmem:[%s1189 + $0xa8] sm:$0xff] %v1232
            %v1234 = vld [vmem:[%s1188 + $0xb0] sm:$0xff]
            %1235 = vst [vmem:[%s1189 + $0xb0] sm:$0xff] %v1234
            %v1236 = vld [vmem:[%s1188 + $0xb8] sm:$0xff]
            %1237 = vst [vmem:[%s1189 + $0xb8] sm:$0xff] %v1236
            %v1238 = vld [vmem:[%s1188 + $0xc0] sm:$0xff]
            %1239 = vst [vmem:[%s1189 + $0xc0] sm:$0xff] %v1238
          $region50: #{generator_forward.1} parent=44 // loop_footer
            %s1187 = sadd.s32 1, %s1183
          $region51: #{generator_forward.1} parent=44 // loop_footer_branch
            %1182 = sbr.rel target = $region47
          $region52: #{generator_forward.1} parent=44 // loop_exit
            _
        $region45: #{generator_forward.1} parent=36 // pred_fallthru
          _
      $region37: #{generator_forward.1} parent=32 // pred_fallthru
        _
      %1302 = vnop
    $region33: #{generator_forward.1} parent=1 // pred_fallthru
      _
    // Predicated region
    $region68: #{generator_forward.1} parent=1 // pred_check
      _
    $region69: #{generator_forward.1} parent=1 // pred_check_branch
      %1304 = sbr.rel (0) target = $region71
    $region70: #{generator_forward.1} parent=1 // pred_region
      _
    $region71: #{generator_forward.1} parent=1 // pred_fallthru
      _

</llo_original>
